<compile_context>
chip_gen: v5e
topology: v5e:2x2
jax: 0.10.0
libtpu: 0.0.40
codegen_flags: <defaults>
</compile_context>

<pallas_src>
import functools

import jax
import jax.numpy as jnp
from jax import lax
from jax.experimental import pallas as pl
from jax.experimental.pallas import tpu as pltpu


_LANE = 128      # lane width: class (output) dim padded to a multiple of this
_SUBLANE = 8     # batch-tile granularity
_MAX_TN = 256    # class tile (matches 256-wide MXU on v6e/v7x)


def _round_up(v, m):
    return (v + m - 1) // m * m


def _vmem_capacity_bytes():
    """Physical VMEM per TensorCore; conservative fallback if the query is unavailable."""
    try:
        return int(pltpu.get_tpu_info().vmem_capacity_bytes)
    except Exception:
        return 64 * 1024 * 1024  # v7x per-TC size (most restrictive generation)


def _linear_kernel(x_ref, w_ref, b_ref, o_ref):
    # x_ref: (tm, K) in the caller's dtype | w_ref: (tn, K) compute dtype (nn.Linear layout)
    # b_ref: (1, tn) f32                   | o_ref: (tm, tn) f32
    # In-kernel cast of x (VPU work, hidden under DMA/MXU); no-op if dtypes already match.
    x = x_ref[...].astype(w_ref.dtype)
    # Contract x dim 1 with weight dim 1 => x @ W^T on the MXU, f32 accumulation.
    acc = lax.dot_general(
        x, w_ref[...],
        dimension_numbers=(((1,), (1,)), ((), ())),
        preferred_element_type=jnp.float32,
    )
    o_ref[...] = (acc + b_ref[...]).astype(o_ref.dtype)


def _pallas_linear(x, w_p, b_p, num_class):
    """logits = x @ W^T + b with W already class-padded/cast (see LogisticRegressionPallas)."""
    batch, num_dim = x.shape
    c_pad = w_p.shape[0]

    vmem_cap = _vmem_capacity_bytes()
    max_tm = 1024 if vmem_cap >= (96 << 20) else 512   # bigger tiles where VMEM is abundant

    # Class tile: lane-dense, at most 256; param prep guarantees c_pad divides evenly.
    tn = c_pad if c_pad <= _MAX_TN else _MAX_TN

    # Batch tile: multiple of 8, aim for >= 2 grid steps (v7x megacore), cap so the
    # double-buffered x tile fits comfortably in VMEM on every generation.
    x_itemsize = jnp.dtype(x.dtype).itemsize
    w_itemsize = jnp.dtype(w_p.dtype).itemsize
    tm = _round_up(pl.cdiv(batch, 2), _SUBLANE)
    tm = min(tm, max_tm)
    x_budget = vmem_cap // 3                            # headroom for W/out buffers
    tm_cap = (x_budget // (2 * max(num_dim, 1) * x_itemsize)) // _SUBLANE * _SUBLANE
    tm = max(_SUBLANE, min(tm, max(tm_cap, _SUBLANE)))

    nc = pl.cdiv(c_pad, tn)                             # class tiles (outer)
    nb = pl.cdiv(batch, tm)                             # batch tiles (inner, masked tail)

    # Explicit VMEM budget computed from actual (double-buffered) tile footprints.
    # TODO(synk): mark the W/bias specs pipeline_mode=pl.Buffered(1) once single-buffered
    # resident operands are verified on the target jax build (halves the W VMEM footprint).
    tile_bytes = 2 * (tm * num_dim * x_itemsize          # x tile
                      + tn * num_dim * w_itemsize        # W tile
                      + tn * 4                           # bias tile
                      + tm * tn * 4)                     # out tile
    vmem_limit = int(min(max(int(tile_bytes * 1.25) + (2 << 20), 8 << 20), vmem_cap))

    cost = pl.CostEstimate(
        flops=2 * batch * num_dim * c_pad,
        transcendentals=0,
        bytes_accessed=(batch * num_dim * x_itemsize
                        + c_pad * num_dim * w_itemsize
                        + c_pad * 4
                        + batch * c_pad * 4),
    )

    out = pl.pallas_call(
        _linear_kernel,
        out_shape=jax.ShapeDtypeStruct((batch, c_pad), jnp.float32),
        grid_spec=pltpu.PrefetchScalarGridSpec(
            num_scalar_prefetch=0,
            grid=(nc, nb),                                          # class outer, batch inner
            in_specs=[
                pl.BlockSpec((tm, num_dim), lambda j, i: (i, 0)),   # x: streamed over batch
                pl.BlockSpec((tn, num_dim), lambda j, i: (j, 0)),   # W: resident per class tile
                pl.BlockSpec((1, tn), lambda j, i: (0, j)),         # bias tile
            ],
            out_specs=pl.BlockSpec((tm, tn), lambda j, i: (i, j)),
        ),
        compiler_params=pltpu.CompilerParams(
            dimension_semantics=("parallel", "parallel"),           # fully independent tiles
            vmem_limit_bytes=vmem_limit,
        ),
        cost_estimate=cost,
    )(x, w_p, b_p)

    # Drop the zero-padded class columns so downstream argmax never sees them.
    if c_pad != num_class:
        out = out[:, :num_class]
    return out


class LogisticRegressionPallas:
    """Pallas TPU port of LogisticRegression(num_dim, num_class).

    Weight/bias prep (class-dim padding to a lane/tile multiple + cast to the compute
    dtype) happens ONCE here and is cached, not per forward call.
    """

    def __init__(self, weight, bias, compute_dtype=jnp.bfloat16):
        num_class, num_dim = weight.shape
        c_pad = _round_up(num_class, _LANE)
        if c_pad > _MAX_TN:
            c_pad = _round_up(c_pad, _MAX_TN)   # class grid divides evenly
        self.num_class = int(num_class)
        self.num_dim = int(num_dim)
        # TODO(synk): also pad num_dim (K) to a multiple of 128 offline (and feed x with the
        # padded K) when K % 128 != 0 to restore a fully lane-dense MXU feed.
        self.w_p = (jnp.zeros((c_pad, num_dim), compute_dtype)
                    .at[:num_class, :].set(weight.astype(compute_dtype)))
        self.b_p = (jnp.zeros((1, c_pad), jnp.float32)
                    .at[0, :num_class].set(bias.astype(jnp.float32)))
        self._forward = jax.jit(functools.partial(_pallas_linear, num_class=self.num_class))

    def __call__(self, g, x, *args):
        del g, args                              # graph arg is unused, matching the module
        return self._forward(x, self.w_p, self.b_p)


if __name__ == "__main__":
    key = jax.random.PRNGKey(0)
    k_x, k_w, k_b = jax.random.split(key, 3)

    batch, num_dim, num_class = 8, 32, 16

    # Deterministic synthetic parameters (shapes match nn.Linear(num_dim, num_class)).
    x = jax.random.normal(k_x, (batch, num_dim), dtype=jnp.float32)
    weight = jax.random.normal(k_w, (num_class, num_dim), dtype=jnp.float32) * 0.1
    bias = jax.random.normal(k_b, (num_class,), dtype=jnp.float32) * 0.1
    g = None  # graph arg is unused by the module's forward

    model = LogisticRegressionPallas(weight, bias)       # one-time param prep (cached)
    logits = model(g, x)
    logits = jax.block_until_ready(logits)
    assert logits.shape == (batch, num_class)

    # References: bf16-multiply / f32-accumulate (tight) and pure-f32 PyTorch math (loose).
    xb = x.astype(jnp.bfloat16).astype(jnp.float32)
    wb = weight.astype(jnp.bfloat16).astype(jnp.float32)
    ref_bf16 = jnp.matmul(xb, wb.T, precision=lax.Precision.HIGHEST) + bias
    ref_f32 = jnp.matmul(x, weight.T, precision=lax.Precision.HIGHEST) + bias
    assert jnp.allclose(logits, ref_bf16, atol=2e-3, rtol=2e-3)
    assert jnp.allclose(logits, ref_f32, atol=3e-2, rtol=3e-2)

    # Exposed dtype flag: f32 compute path stays close to the exact PyTorch f32 math.
    model_f32 = LogisticRegressionPallas(weight, bias, compute_dtype=jnp.float32)
    logits_f32 = jax.block_until_ready(model_f32(g, x))
    assert logits_f32.shape == (batch, num_class)
    assert jnp.allclose(logits_f32, ref_f32, atol=5e-3, rtol=5e-3)

    print("KERNEL_OK")
</pallas_src>

<mosaic_0001>
module attributes {stable_mosaic.version = 11 : i64} {
  func.func @_linear_kernel(%arg0: i32, %arg1: i32, %arg2: memref<8x32xf32, #tpu.memory_space<vmem>>, %arg3: memref<128x32xbf16, #tpu.memory_space<vmem>>, %arg4: memref<1x128xf32, #tpu.memory_space<vmem>>, %arg5: memref<8x128xf32, #tpu.memory_space<vmem>>) attributes {dimension_semantics = [#tpu.dimension_semantics<parallel>, #tpu.dimension_semantics<parallel>], iteration_bounds = array<i64: 1, 1>, scalar_prefetch = 0 : i64, scratch_operands = 0 : i64, tpu.core_type = #tpu.core_type<tc>, window_params = [{transform_indices = @transform_0, window_bounds = array<i64: 8, 32>}, {transform_indices = @transform_1, window_bounds = array<i64: 128, 32>}, {transform_indices = @transform_2, window_bounds = array<i64: 1, 128>}, {transform_indices = @transform_3, window_bounds = array<i64: 8, 128>}]} {
    %c0 = arith.constant 0 : index
    %c0_0 = arith.constant 0 : index
    %0 = vector.load %arg2[%c0, %c0_0] : memref<8x32xf32, #tpu.memory_space<vmem>>, vector<8x32xf32>
    %1 = arith.truncf %0 : vector<8x32xf32> to vector<8x32xbf16>
    %c0_1 = arith.constant 0 : index
    %c0_2 = arith.constant 0 : index
    %2 = vector.load %arg3[%c0_1, %c0_2] : memref<128x32xbf16, #tpu.memory_space<vmem>>, vector<128x32xbf16>
    %cst = arith.constant dense<0.000000e+00> : vector<8x128xf32>
    %3 = tpu.matmul %1, %2, %cst {dimension_numbers = #tpu.dot_dimension_numbers<[1], [1], [0], [0], [0, 0, 1, 0], [], []>} : vector<8x32xbf16>, vector<128x32xbf16>, vector<8x128xf32> -> vector<8x128xf32>
    %c0_3 = arith.constant 0 : index
    %c0_4 = arith.constant 0 : index
    %4 = vector.load %arg4[%c0_3, %c0_4] : memref<1x128xf32, #tpu.memory_space<vmem>>, vector<1x128xf32>
    %5 = vector.broadcast %4 : vector<1x128xf32> to vector<8x128xf32>
    %6 = arith.addf %3, %5 : vector<8x128xf32>
    %c0_5 = arith.constant 0 : index
    %c0_6 = arith.constant 0 : index
    %7 = vector.load %arg5[%c0_5, %c0_6] : memref<8x128xf32, #tpu.memory_space<vmem>>, vector<8x128xf32>
    tpu.vector_store %arg5[%c0_5, %c0_6], %6 {strides = array<i32>} : memref<8x128xf32, #tpu.memory_space<vmem>>, vector<8x128xf32>,
    return
  }
  func.func @transform_0(%arg0: i32, %arg1: i32) -> (i32, i32) {
    %c0_i32 = arith.constant 0 : i32
    %c0_i32_0 = arith.constant 0 : i32
    return %arg1, %c0_i32 : i32, i32
  }
  func.func @transform_1(%arg0: i32, %arg1: i32) -> (i32, i32) {
    %c0_i32 = arith.constant 0 : i32
    %c0_i32_0 = arith.constant 0 : i32
    return %arg0, %c0_i32 : i32, i32
  }
  func.func @transform_2(%arg0: i32, %arg1: i32) -> (i32, i32) {
    %c0_i32 = arith.constant 0 : i32
    %c0_i32_0 = arith.constant 0 : i32
    return %c0_i32, %arg0 : i32, i32
  }
  func.func @transform_3(%arg0: i32, %arg1: i32) -> (i32, i32) {
    %c0_i32 = arith.constant 0 : i32
    return %arg1, %arg0 : i32, i32
  }
}

</mosaic_0001>

<llo_original>
// kernel: _pallas_linear.1
$region0: #{_pallas_linear.1}
  #allocation0 [shape = 'u32[]', space=smem, size = 0x4, offset = 0x4, fixed_abs, tag = 'smem constant byte address 0x4 - core index']
  #allocation1 [shape = 'u32[72,128]{1,0:T(1,128)}', space=vmem, size = 0x9000, scoped, tag = 'internal scratch']
  %s0 = inlined_call_operand.vmem [shape: f32[8,32], index: 0, kind: input, shape index: {}]
  %s1 = inlined_call_operand.vmem [shape: bf16[128,32], index: 1, kind: input, shape index: {}]
  %s2 = inlined_call_operand.vmem [shape: f32[1,128], index: 2, kind: input, shape index: {}]
  %s3 = inlined_call_operand.hbm [shape: f32[8,128], index: 3, kind: output, shape index: {}]
  %s4 = sld [smem:[#allocation0]]
  $region22: #{_pallas_linear.1} parent=0
    _
  %s6 = ssub.s32 1, %s4
  %s7 = scalar_select 0, %s6, %s4
  $region1: #{_pallas_linear.1} parent=0
    #allocation2 [shape = 'u8[4096]{0}', space=vmem, size = 0x1000, scoped, tag = 'output window, operand 0, single buffered']
    #allocation3 [shape = 's32[1]{0}', space=sflag, size = 0x4, scoped, tag = 'scoped memory for _pallas_linear.1']
    %8 = vsyncpa [#allocation3], 0
    // Predicated region
    $region2: #{_pallas_linear.1} parent=1 // pred_check
      _
    $region3: #{_pallas_linear.1} parent=1 // pred_check_branch
      %10 = sbr.rel (0) target = $region5
    $region4: #{_pallas_linear.1} parent=1 // pred_region
      _
    $region5: #{_pallas_linear.1} parent=1 // pred_fallthru
      _
    // Predicated region
    $region6: #{_pallas_linear.1} parent=1 // pred_check
      _
    $region7: #{_pallas_linear.1} parent=1 // pred_check_branch
      %12 = sbr.rel (0) target = $region9
    $region8: #{_pallas_linear.1} parent=1 // pred_region
      _
    $region9: #{_pallas_linear.1} parent=1 // pred_fallthru
      _
    // Predicated region
    $region10: #{_pallas_linear.1} parent=1 // pred_check
      _
    $region11: #{_pallas_linear.1} parent=1 // pred_check_branch
      %14 = sbr.rel (0) target = $region13
    $region12: #{_pallas_linear.1} parent=1 // pred_region
      _
    $region13: #{_pallas_linear.1} parent=1 // pred_fallthru
      _
    %v15 = vld [vmem:[%s0] sm:$0xff]
    %v16 = vpack.c.bf16 %v15, %v15
    %v17 = vld [vmem:[%s1] sm:$0xf]
    %v18 = vld [vmem:[%s1 + $0x4] sm:$0xf]
    %v19 = vld [vmem:[%s1 + $0x8] sm:$0xf]
    %v20 = vld [vmem:[%s1 + $0xc] sm:$0xf]
    %v21 = vld [vmem:[%s1 + $0x10] sm:$0xf]
    %v22 = vld [vmem:[%s1 + $0x14] sm:$0xf]
    %v23 = vld [vmem:[%s1 + $0x18] sm:$0xf]
    %v24 = vld [vmem:[%s1 + $0x1c] sm:$0xf]
    %v25 = vld [vmem:[%s1 + $0x20] sm:$0xf]
    %v26 = vld [vmem:[%s1 + $0x24] sm:$0xf]
    %v27 = vld [vmem:[%s1 + $0x28] sm:$0xf]
    %v28 = vld [vmem:[%s1 + $0x2c] sm:$0xf]
    %v29 = vld [vmem:[%s1 + $0x30] sm:$0xf]
    %v30 = vld [vmem:[%s1 + $0x34] sm:$0xf]
    %v31 = vld [vmem:[%s1 + $0x38] sm:$0xf]
    %v32 = vld [vmem:[%s1 + $0x3c] sm:$0xf]
    %v33 = vld [vmem:[%s2] sm:$0x1]
    %v35 = vperm.slane %v33, 0
    %v53 = vunpack.c.l.b16 %v17
    %v54 = vunpack.c.l.b16 %v18
    %v55 = vunpack.c.l.b16 %v19
    %v56 = vunpack.c.l.b16 %v20
    %v57 = vunpack.c.l.b16 %v21
    %v58 = vunpack.c.l.b16 %v22
    %v59 = vunpack.c.l.b16 %v23
    %v60 = vunpack.c.l.b16 %v24
    %v61 = vunpack.c.l.b16 %v25
    %v62 = vunpack.c.l.b16 %v26
    %v63 = vunpack.c.l.b16 %v27
    %v64 = vunpack.c.l.b16 %v28
    %v65 = vunpack.c.l.b16 %v29
    %v66 = vunpack.c.l.b16 %v30
    %v67 = vunpack.c.l.b16 %v31
    %v68 = vunpack.c.l.b16 %v32
    %v69 = vpack.c.b16 %v54, %v53
    %v70 = vpack.c.b16 %v56, %v55
    %v71 = vpack.c.b16 %v58, %v57
    %v72 = vpack.c.b16 %v60, %v59
    %v73 = vpack.c.b16 %v62, %v61
    %v74 = vpack.c.b16 %v64, %v63
    %v75 = vpack.c.b16 %v66, %v65
    %v76 = vpack.c.b16 %v68, %v67
    %vm77 = vcmask 261120
    %v79 = vsel %vm77, %v16, 0
    %v82 = vsel %vm77, %v69, 0
    %v85 = vsel %vm77, %v70, 0
    %v88 = vsel %vm77, %v71, 0
    %v91 = vsel %vm77, %v72, 0
    %v94 = vsel %vm77, %v73, 0
    %v97 = vsel %vm77, %v74, 0
    %v100 = vsel %vm77, %v75, 0
    %v103 = vsel %vm77, %v76, 0
    %105 = vmatpush.bf16.xpose.msra.mxu0 %v103
    %106 = vmatpush.bf16.xpose.msra.mxu0 %v100
    %107 = vmatpush.bf16.xpose.msra.mxu0 %v97
    %108 = vmatpush.bf16.xpose.msra.mxu0 %v94
    %109 = vmatpush.bf16.xpose.msra.mxu0 %v91
    %110 = vmatpush.bf16.xpose.msra.mxu0 %v88
    %111 = vmatpush.bf16.xpose.msra.mxu0 %v85
    %112 = vmatpush.bf16.xpose.msra.mxu0 %v82
    %113 = vmatmul.bf16.gmra.mxu0 %v79
    %v114 = vpop.f32.mrf.mxu0
    %v115 = vadd.f32 %v35, %v114
    %v116 = vpop.f32.mrf.mxu0
    %117 = vdwg.mxu0
    %118 = vst [vmem:[#allocation2] sm:$0xff] %v115
    // Predicated region
    $region14: #{_pallas_linear.1} parent=1 // pred_check
      _
    $region15: #{_pallas_linear.1} parent=1 // pred_check_branch
      %120 = sbr.rel (0) target = $region17
    $region16: #{_pallas_linear.1} parent=1 // pred_region
      %122 = vsyncadd [#allocation3], 0
      %s124 = sshll.u32 [#allocation2], 4
      %s125 = int_to_ptr.vmem [resolvable:$true] %s124
      %s126 = sshll.u32 %s3, 4
      %s127 = int_to_ptr.hbm [resolvable:$true] %s126
      %129 = dma.vmem_to_hbm [thread:$0]  %s125, 128, %s127, [#allocation3]
    $region17: #{_pallas_linear.1} parent=1 // pred_fallthru
      _
    // Predicated region
    $region18: #{_pallas_linear.1} parent=1 // pred_check
      _
    $region19: #{_pallas_linear.1} parent=1 // pred_check_branch
      %131 = sbr.rel (0) target = $region21
    $region20: #{_pallas_linear.1} parent=1 // pred_region
      %133 = dma.done [#allocation3], 128
    $region21: #{_pallas_linear.1} parent=1 // pred_fallthru
      _
    %134 = vsyncpa [#allocation3], 1

</llo_original>
